<compile_context>
chip_gen: v7x
topology: tpu7x:2x2x1
jax: 0.10.0
libtpu: 0.0.40
codegen_flags: <defaults>
</compile_context>

<pallas_src>
import functools
import math

import jax
import jax.numpy as jnp
from jax import lax
from jax.experimental import pallas as pl
from jax.experimental.pallas import tpu as pltpu

MATMUL_DTYPE = jnp.bfloat16   # MXU operand dtype (f32 accumulation everywhere)
STORE_DTYPE = jnp.bfloat16    # HBM intermediate storage dtype (gates / hiddens)
ACT_DTYPE = jnp.bfloat16      # gate nonlinearity dtype (bf16 EUP on v6e/v7x)

VMEM_LIMIT_BYTES = 48 * 1024 * 1024    # raised scoped VMEM (< v7x 64 MiB physical)
VMEM_BLOCK_BUDGET = 24 * 1024 * 1024   # budget for double-buffered grid blocks


def _pick_chunk(n, target):
    """Largest divisor of n that is <= target (>=1)."""
    c = max(1, min(n, int(target)))
    while n % c:
        c -= 1
    return c


def _budget_chunk(n, bytes_per_unit, cap):
    """Largest divisor of n such that 2x (double-buffered) blocks fit the budget."""
    target = VMEM_BLOCK_BUDGET // max(1, 2 * int(bytes_per_unit))
    return _pick_chunk(n, min(int(cap), max(1, target)))


# ----------------------------------------------------------------------------
# BatchNorm statistics: tiled sum / sum-of-squares over a flat (T*B, C) view
# ----------------------------------------------------------------------------
def _bn_stats_kernel(x_ref, s_ref, q_ref):
    @pl.when(pl.program_id(0) == 0)
    def _():
        s_ref[...] = jnp.zeros_like(s_ref)
        q_ref[...] = jnp.zeros_like(q_ref)

    x = x_ref[...].astype(jnp.float32)                 # (rc, C)
    s_ref[...] += jnp.sum(x, axis=0, keepdims=True)
    q_ref[...] += jnp.sum(x * x, axis=0, keepdims=True)


def bn_stats(x2d):
    """x2d: (T*Bp, C) f32; zero-padded batch rows do not change sum / sumsq."""
    R, C = x2d.shape
    assert R % 8 == 0
    d = _budget_chunk(R // 8, 8 * C * 4, 1024)          # groups of 8 rows
    rc = 8 * d
    return pl.pallas_call(
        _bn_stats_kernel,
        out_shape=(jax.ShapeDtypeStruct((1, C), jnp.float32),
                   jax.ShapeDtypeStruct((1, C), jnp.float32)),
        grid_spec=pltpu.PrefetchScalarGridSpec(
            num_scalar_prefetch=0,
            grid=(R // rc,),
            in_specs=[pl.BlockSpec((rc, C), lambda i: (i, 0))],
            out_specs=[pl.BlockSpec((1, C), lambda i: (0, 0)),
                       pl.BlockSpec((1, C), lambda i: (0, 0))],
        ),
        compiler_params=pltpu.CompilerParams(
            dimension_semantics=("arbitrary",),
            vmem_limit_bytes=VMEM_LIMIT_BYTES),
    )(x2d)


# ----------------------------------------------------------------------------
# Layer-1 input projection with fused BatchNorm and fused directions:
#   gates[t, b] = ((x[t, b] * scale + shift) @ [W_ih_f | W_ih_b]) + [b_f | b_b]
# One (TC*B, C) @ (C, 2*4H) MXU matmul per time chunk; bf16 lane-dense output.
# ----------------------------------------------------------------------------
def _proj_bn_kernel(x_ref, scale_ref, shift_ref, w_ref, b_ref, g_ref):
    x = x_ref[...].astype(jnp.float32)                 # (tc, B, C)
    xn = x * scale_ref[...] + shift_ref[...]           # fused BN (broadcast (1,1,C))
    tc, b, c = xn.shape
    xm = xn.reshape(tc * b, c).astype(MATMUL_DTYPE)
    g = jnp.dot(xm, w_ref[...], preferred_element_type=jnp.float32) + b_ref[...]
    g_ref[...] = g.reshape(tc, b, -1).astype(g_ref.dtype)


def input_proj_bn(x, scale, shift, w_ih, bias):
    T, B, C = x.shape
    G2 = w_ih.shape[1]                                  # 2 * 4H (both directions)
    unit = B * (C * 4 + G2 * 2)                         # block bytes per time step
    tc = _budget_chunk(T, unit, 256)
    return pl.pallas_call(
        _proj_bn_kernel,
        out_shape=jax.ShapeDtypeStruct((T, B, G2), STORE_DTYPE),
        grid_spec=pltpu.PrefetchScalarGridSpec(
            num_scalar_prefetch=0,
            grid=(T // tc,),
            in_specs=[
                pl.BlockSpec((tc, B, C), lambda i: (i, 0, 0)),
                pl.BlockSpec((1, 1, C), lambda i: (0, 0, 0)),
                pl.BlockSpec((1, 1, C), lambda i: (0, 0, 0)),
                pl.BlockSpec((C, G2), lambda i: (0, 0)),
                pl.BlockSpec((1, G2), lambda i: (0, 0)),
            ],
            out_specs=pl.BlockSpec((tc, B, G2), lambda i: (i, 0, 0)),
        ),
        compiler_params=pltpu.CompilerParams(
            dimension_semantics=("parallel",),
            vmem_limit_bytes=VMEM_LIMIT_BYTES),
    )(x, scale, shift, w_ih, bias)


# ----------------------------------------------------------------------------
# Pyramid input projection (layers 2 and 3), fused directions:
# next-layer input at reduced step t2 is concat(hf[2t2], hb[2t2], hf[2t2+1], hb[2t2+1]);
# gates = fe@W[0:H] + be@W[H:2H] + fo@W[2H:3H] + bo@W[3H:4H] + b with W = (4H, 2*4H).
# Time pairing happens via the (2*TC) input block + free leading-dim reshapes.
# ----------------------------------------------------------------------------
def _pyramid_proj_kernel(yf_ref, yb_ref, w_ref, b_ref, g_ref, *, hidden):
    H = hidden
    yf = yf_ref[...]                                    # (2*tc, B, H) bf16
    yb = yb_ref[...]
    t2x, b, _ = yf.shape
    tc = t2x // 2
    yf = yf.reshape(tc, 2, b, H)
    yb = yb.reshape(tc, 2, b, H)
    fe = yf[:, 0].reshape(tc * b, H)                    # hf at even steps
    fo = yf[:, 1].reshape(tc * b, H)                    # hf at odd steps
    be = yb[:, 0].reshape(tc * b, H)
    bo = yb[:, 1].reshape(tc * b, H)

    acc = jnp.dot(fe, w_ref[0:H, :], preferred_element_type=jnp.float32)
    acc = acc + jnp.dot(be, w_ref[H:2 * H, :], preferred_element_type=jnp.float32)
    acc = acc + jnp.dot(fo, w_ref[2 * H:3 * H, :], preferred_element_type=jnp.float32)
    acc = acc + jnp.dot(bo, w_ref[3 * H:4 * H, :], preferred_element_type=jnp.float32)
    acc = acc + b_ref[...]
    g_ref[...] = acc.reshape(tc, b, g_ref.shape[-1]).astype(g_ref.dtype)


def pyramid_proj(yf, yb, w_ih, bias, hidden):
    T, B, H = yf.shape
    T2 = T // 2                                          # crop odd tail (l - l % 2)
    G2 = w_ih.shape[1]                                   # 2 * 4H
    unit = B * (4 * H * 2 + G2 * 2)                      # block bytes per reduced step
    tc = _budget_chunk(T2, unit, 128)
    return pl.pallas_call(
        functools.partial(_pyramid_proj_kernel, hidden=hidden),
        out_shape=jax.ShapeDtypeStruct((T2, B, G2), STORE_DTYPE),
        grid_spec=pltpu.PrefetchScalarGridSpec(
            num_scalar_prefetch=0,
            grid=(T2 // tc,),
            in_specs=[
                pl.BlockSpec((2 * tc, B, H), lambda i: (i, 0, 0)),
                pl.BlockSpec((2 * tc, B, H), lambda i: (i, 0, 0)),
                pl.BlockSpec((4 * hidden, G2), lambda i: (0, 0)),
                pl.BlockSpec((1, G2), lambda i: (0, 0)),
            ],
            out_specs=pl.BlockSpec((tc, B, G2), lambda i: (i, 0, 0)),
        ),
        compiler_params=pltpu.CompilerParams(
            dimension_semantics=("parallel",),
            vmem_limit_bytes=VMEM_LIMIT_BYTES),
    )(yf, yb, w_ih, bias)


# ----------------------------------------------------------------------------
# Fused bidirectional LSTM recurrence.
# Grid iterates over time CHUNKS ("arbitrary" = sequential).  The combined gates
# array (T, B, 2*4H) is read twice through two BlockSpecs: forward gates = lane
# block 0 at time chunk c; backward gates = lane block 1 at time chunk nc-1-c
# (reversal is pure index-map plumbing, no data flips in HBM).  h/c are carried
# in registers across the chunk; scratch is touched once per grid step.
# ----------------------------------------------------------------------------
def _birnn_kernel(gf_ref, gb_ref, whf_ref, whb_ref,
                  yf_ref, yb_ref, hN_ref, cN_ref,
                  hf_sc, cf_sc, hb_sc, cb_sc, *, hidden, chunk):
    c = pl.program_id(0)
    nc = pl.num_programs(0)
    H = hidden

    @pl.when(c == 0)
    def _():
        hf_sc[...] = jnp.zeros_like(hf_sc)
        cf_sc[...] = jnp.zeros_like(cf_sc)
        hb_sc[...] = jnp.zeros_like(hb_sc)
        cb_sc[...] = jnp.zeros_like(cb_sc)

    whf = whf_ref[...]                                  # (H, 4H) bf16, chunk-resident
    whb = whb_ref[...]

    def cell(gates_in, h_prev, c_prev, whh):
        g = gates_in.astype(jnp.float32) + jnp.dot(
            h_prev.astype(MATMUL_DTYPE), whh, preferred_element_type=jnp.float32)
        ga = g.astype(ACT_DTYPE)                        # bf16 EUP on v6e/v7x
        i_g = jax.nn.sigmoid(ga[:, 0:H]).astype(jnp.float32)
        f_g = jax.nn.sigmoid(ga[:, H:2 * H]).astype(jnp.float32)
        g_g = jnp.tanh(ga[:, 2 * H:3 * H]).astype(jnp.float32)
        o_g = jax.nn.sigmoid(ga[:, 3 * H:4 * H]).astype(jnp.float32)
        c_new = f_g * c_prev + i_g * g_g                # f32 state update
        h_new = o_g * jnp.tanh(c_new.astype(ACT_DTYPE)).astype(jnp.float32)
        return h_new, c_new

    def step(i, carry):
        hf, cf, hb, cb = carry
        # forward step: local time index i (global time increasing)
        hf, cf = cell(gf_ref[i], hf, cf, whf)
        yf_ref[i] = hf.astype(yf_ref.dtype)
        # backward step: local time index chunk-1-i (global time decreasing)
        j = chunk - 1 - i
        hb, cb = cell(gb_ref[j], hb, cb, whb)
        yb_ref[j] = hb.astype(yb_ref.dtype)
        return hf, cf, hb, cb

    carry0 = (hf_sc[...], cf_sc[...], hb_sc[...], cb_sc[...])
    hf, cf, hb, cb = lax.fori_loop(0, chunk, step, carry0,
                                   unroll=math.gcd(chunk, 4))

    hf_sc[...] = hf
    cf_sc[...] = cf
    hb_sc[...] = hb
    cb_sc[...] = cb

    @pl.when(c == nc - 1)
    def _():
        hN_ref[0] = hf.astype(hN_ref.dtype)
        hN_ref[1] = hb.astype(hN_ref.dtype)
        cN_ref[0] = cf.astype(cN_ref.dtype)
        cN_ref[1] = cb.astype(cN_ref.dtype)


def birnn(gates, whh_f, whh_b):
    """gates: combined fwd|bwd input gates (T, B, 2*4H) bf16; whh_*: (H, 4H) bf16."""
    T, B, G2 = gates.shape
    G = G2 // 2
    H = whh_f.shape[0]
    if G % 128 != 0:
        raise ValueError("4*hidden must be a multiple of 128 for direction-blocked "
                         "gate loads (got %d)" % G)

    unit = B * (G2 * 2 + 2 * H * 2)                      # block bytes per time step
    ch = _budget_chunk(T, unit, 64)
    nc = T // ch

    cost = pl.CostEstimate(
        flops=int(2 * (2 * T * B * H * G) + 12 * T * B * G),
        transcendentals=int(2 * 5 * T * B * H),
        bytes_accessed=int(2 * (T * B * G2 + 2 * T * B * H)
                           + 2 * 2 * H * G + 4 * 4 * B * H),
    )

    out_shape = (
        jax.ShapeDtypeStruct((T, B, H), STORE_DTYPE),    # forward hiddens
        jax.ShapeDtypeStruct((T, B, H), STORE_DTYPE),    # backward hiddens (time-indexed)
        jax.ShapeDtypeStruct((2, B, H), jnp.float32),    # final h (fwd, bwd)
        jax.ShapeDtypeStruct((2, B, H), jnp.float32),    # final c (fwd, bwd)
    )
    grid_spec = pltpu.PrefetchScalarGridSpec(
        num_scalar_prefetch=0,
        grid=(nc,),
        in_specs=[
            pl.BlockSpec((ch, B, G), lambda i: (i, 0, 0)),            # fwd gates
            pl.BlockSpec((ch, B, G), lambda i: (nc - 1 - i, 0, 1)),   # bwd gates (reversed)
            pl.BlockSpec((H, G), lambda i: (0, 0)),
            pl.BlockSpec((H, G), lambda i: (0, 0)),
        ],
        out_specs=[
            pl.BlockSpec((ch, B, H), lambda i: (i, 0, 0)),
            pl.BlockSpec((ch, B, H), lambda i: (nc - 1 - i, 0, 0)),
            pl.BlockSpec((2, B, H), lambda i: (0, 0, 0)),
            pl.BlockSpec((2, B, H), lambda i: (0, 0, 0)),
        ],
        scratch_shapes=[pltpu.VMEM((B, H), jnp.float32)] * 4,
    )
    return pl.pallas_call(
        functools.partial(_birnn_kernel, hidden=H, chunk=ch),
        out_shape=out_shape,
        grid_spec=grid_spec,
        compiler_params=pltpu.CompilerParams(
            dimension_semantics=("arbitrary",),
            vmem_limit_bytes=VMEM_LIMIT_BYTES),
        cost_estimate=cost,
    )(gates, gates, whh_f, whh_b)


# ----------------------------------------------------------------------------
# Parameter init (deterministic; PyTorch-LSTM-style uniform(-1/sqrt(H), 1/sqrt(H)))
# Input-projection weights of both directions are pre-concatenated along N to
# (in, 2*4H) bf16; hidden-hidden weights stay per-direction (H, 4H) bf16.
# ----------------------------------------------------------------------------
def init_lstm_dir(key, input_size, hidden):
    k = 1.0 / math.sqrt(hidden)
    k0, k1, k2, k3 = jax.random.split(key, 4)
    w_ih = jax.random.uniform(k0, (4 * hidden, input_size), minval=-k, maxval=k)
    w_hh = jax.random.uniform(k1, (4 * hidden, hidden), minval=-k, maxval=k)
    b_ih = jax.random.uniform(k2, (4 * hidden,), minval=-k, maxval=k)
    b_hh = jax.random.uniform(k3, (4 * hidden,), minval=-k, maxval=k)
    return w_ih.T, w_hh.T.astype(MATMUL_DTYPE), (b_ih + b_hh)


def init_bilstm(key, input_size, hidden):
    kf, kb = jax.random.split(key, 2)
    wf, whf, bf = init_lstm_dir(kf, input_size, hidden)
    wb, whb, bb = init_lstm_dir(kb, input_size, hidden)
    w_ih = jnp.concatenate([wf, wb], axis=1).astype(MATMUL_DTYPE)       # (in, 2*4H)
    bias = jnp.concatenate([bf, bb]).reshape(1, -1).astype(jnp.float32)  # (1, 2*4H)
    return (w_ih, bias, whf, whb)


def init_listener_params(key, dim, hidden):
    k1, k2, k3 = jax.random.split(key, 3)
    return {
        "bn_gamma": jnp.ones((dim,), jnp.float32),
        "bn_beta": jnp.zeros((dim,), jnp.float32),
        "lstm1": init_bilstm(k1, dim, hidden),
        "lstm2": init_bilstm(k2, 4 * hidden, hidden),
        "lstm3": init_bilstm(k3, 4 * hidden, hidden),
    }


# ----------------------------------------------------------------------------
# Listener forward
# ----------------------------------------------------------------------------
def listener_forward(features, params):
    """features: list of (L, dim) arrays (equal lengths, sorted desc)."""
    lens = [int(f.shape[0]) for f in features]
    x = jnp.stack(features, axis=1).astype(jnp.float32)        # (T, B, dim)
    T, B, C = x.shape
    H = params["lstm1"][2].shape[0]                             # hidden size

    # Pad batch to a multiple of 8 sublanes (outputs/stats use the true batch).
    Bp = ((B + 7) // 8) * 8
    if Bp != B:
        x = jnp.pad(x, ((0, 0), (0, Bp - B), (0, 0)))

    # BatchNorm batch statistics (zero-padded rows don't perturb sum / sumsq).
    s, q = bn_stats(x.reshape(T * Bp, C))
    count = float(T * B)
    mean = s[0] / count
    var = jnp.maximum(q[0] / count - mean * mean, 0.0)
    inv = jax.lax.rsqrt(var + 1e-5)
    scale = (params["bn_gamma"] * inv).reshape(1, 1, C)
    shift = (params["bn_beta"] - mean * params["bn_gamma"] * inv).reshape(1, 1, C)

    # ---- BiLSTM 1 (BN fused into the fused-direction input projection) ----
    w1, b1, whf1, whb1 = params["lstm1"]
    g = input_proj_bn(x, scale, shift, w1, b1)
    yf, yb, _, _ = birnn(g, whf1, whb1)
    lens = [l // 2 for l in lens]

    # ---- BiLSTM 2 (pyramid pairing folded into the projection) ----
    w2, b2, whf2, whb2 = params["lstm2"]
    g = pyramid_proj(yf, yb, w2, b2, H)
    yf, yb, _, _ = birnn(g, whf2, whb2)
    lens = [l // 2 for l in lens]

    # ---- BiLSTM 3 ----
    w3, b3, whf3, whb3 = params["lstm3"]
    g = pyramid_proj(yf, yb, w3, b3, H)
    yf, yb, h_n, c_n = birnn(g, whf3, whb3)

    # Final concat (small (T//4, B, 2H) op) + strip batch padding.
    y = jnp.concatenate([yf, yb], axis=-1)[:, :B, :].astype(jnp.float32)
    h_n = h_n[:, :B, :]
    c_n = c_n[:, :B, :]

    # lockdrop3 -> identity (eval)   # TODO(synk): locked dropout not applied
    return y, lens, (h_n, c_n)


if __name__ == "__main__":
    # Small shapes consistent with the module: B=2 sequences, length L=8,
    # feature dim=16, rnn_hidden_size=32 (so LSTM2/3 input = 4*hidden = 128).
    B, L, DIM, HID = 2, 8, 16, 32

    key = jax.random.PRNGKey(0)
    k_feat, k_par = jax.random.split(key)
    feats = jax.random.normal(k_feat, (L, B, DIM), dtype=jnp.float32)
    features = [feats[:, b, :] for b in range(B)]               # list of (L, dim)

    params = init_listener_params(k_par, DIM, HID)

    out, lens, (h_n, c_n) = listener_forward(features, params)
    jax.block_until_ready(out)
    jax.block_until_ready(h_n)
    jax.block_until_ready(c_n)

    assert out.shape == (L // 4, B, 2 * HID), out.shape         # (2, 2, 64)
    assert lens == [L // 4] * B, lens
    assert h_n.shape == (2, B, HID) and c_n.shape == (2, B, HID)
    assert bool(jnp.all(jnp.isfinite(out)))
    print("KERNEL_OK")
</pallas_src>

<mosaic_0001>
module attributes {stable_mosaic.version = 11 : i64} {
  func.func @_bn_stats_kernel(%arg0: i32, %arg1: memref<64x16xf32, #tpu.memory_space<vmem>>, %arg2: memref<1x16xf32, #tpu.memory_space<vmem>>, %arg3: memref<1x16xf32, #tpu.memory_space<vmem>>) attributes {dimension_semantics = [#tpu.dimension_semantics<arbitrary>], iteration_bounds = array<i64: 1>, scalar_prefetch = 0 : i64, scratch_operands = 0 : i64, tpu.core_type = #tpu.core_type<tc>, window_params = [{transform_indices = @transform_0, window_bounds = array<i64: 64, 16>}, {pipeline_mode = #tpu.pipeline_mode<synchronous>, transform_indices = @transform_1, window_bounds = array<i64: 1, 16>}, {pipeline_mode = #tpu.pipeline_mode<synchronous>, transform_indices = @transform_2, window_bounds = array<i64: 1, 16>}]} {
    %c0_i32 = arith.constant 0 : i32
    %0 = arith.cmpi eq, %arg0, %c0_i32 : i32
    %1 = arith.extui %0 : i1 to i32
    %c0_i32_0 = arith.constant 0 : i32
    %2 = arith.cmpi ne, %1, %c0_i32_0 : i32
    scf.if %2 {
      %cst_11 = arith.constant 0.000000e+00 : f32
      %15 = vector.broadcast %cst_11 : f32 to vector<1x16xf32>
      %c0_12 = arith.constant 0 : index
      %c0_13 = arith.constant 0 : index
      %16 = vector.load %arg2[%c0_12, %c0_13] : memref<1x16xf32, #tpu.memory_space<vmem>>, vector<1x16xf32>
      tpu.vector_store %arg2[%c0_12, %c0_13], %15 {strides = array<i32>} : memref<1x16xf32, #tpu.memory_space<vmem>>, vector<1x16xf32>,
      %cst_14 = arith.constant 0.000000e+00 : f32
      %17 = vector.broadcast %cst_14 : f32 to vector<1x16xf32>
      %c0_15 = arith.constant 0 : index
      %c0_16 = arith.constant 0 : index
      %18 = vector.load %arg3[%c0_15, %c0_16] : memref<1x16xf32, #tpu.memory_space<vmem>>, vector<1x16xf32>
      tpu.vector_store %arg3[%c0_15, %c0_16], %17 {strides = array<i32>} : memref<1x16xf32, #tpu.memory_space<vmem>>, vector<1x16xf32>,
    } else {
    }
    %c0 = arith.constant 0 : index
    %c0_1 = arith.constant 0 : index
    %3 = vector.load %arg1[%c0, %c0_1] : memref<64x16xf32, #tpu.memory_space<vmem>>, vector<64x16xf32>
    %c0_2 = arith.constant 0 : index
    %c0_3 = arith.constant 0 : index
    %4 = vector.load %arg2[%c0_2, %c0_3] : memref<1x16xf32, #tpu.memory_space<vmem>>, vector<1x16xf32>
    %cst = arith.constant dense<0.000000e+00> : vector<16xf32>
    %5 = vector.multi_reduction <add>, %3, %cst [0] : vector<64x16xf32> to vector<16xf32>
    %6 = vector.shape_cast %5 : vector<16xf32> to vector<1x16xf32>
    %7 = arith.addf %4, %6 : vector<1x16xf32>
    %c0_4 = arith.constant 0 : index
    %c0_5 = arith.constant 0 : index
    %8 = vector.load %arg2[%c0_4, %c0_5] : memref<1x16xf32, #tpu.memory_space<vmem>>, vector<1x16xf32>
    tpu.vector_store %arg2[%c0_4, %c0_5], %7 {strides = array<i32>} : memref<1x16xf32, #tpu.memory_space<vmem>>, vector<1x16xf32>,
    %c0_6 = arith.constant 0 : index
    %c0_7 = arith.constant 0 : index
    %9 = vector.load %arg3[%c0_6, %c0_7] : memref<1x16xf32, #tpu.memory_space<vmem>>, vector<1x16xf32>
    %10 = arith.mulf %3, %3 : vector<64x16xf32>
    %cst_8 = arith.constant dense<0.000000e+00> : vector<16xf32>
    %11 = vector.multi_reduction <add>, %10, %cst_8 [0] : vector<64x16xf32> to vector<16xf32>
    %12 = vector.shape_cast %11 : vector<16xf32> to vector<1x16xf32>
    %13 = arith.addf %9, %12 : vector<1x16xf32>
    %c0_9 = arith.constant 0 : index
    %c0_10 = arith.constant 0 : index
    %14 = vector.load %arg3[%c0_9, %c0_10] : memref<1x16xf32, #tpu.memory_space<vmem>>, vector<1x16xf32>
    tpu.vector_store %arg3[%c0_9, %c0_10], %13 {strides = array<i32>} : memref<1x16xf32, #tpu.memory_space<vmem>>, vector<1x16xf32>,
    return
  }
  func.func @transform_0(%arg0: i32) -> (i32, i32) {
    %c0_i32 = arith.constant 0 : i32
    %c0_i32_0 = arith.constant 0 : i32
    return %arg0, %c0_i32 : i32, i32
  }
  func.func @transform_1(%arg0: i32) -> (i32, i32) {
    %c0_i32 = arith.constant 0 : i32
    %c0_i32_0 = arith.constant 0 : i32
    %c0_i32_1 = arith.constant 0 : i32
    return %c0_i32, %c0_i32_0 : i32, i32
  }
  func.func @transform_2(%arg0: i32) -> (i32, i32) {
    %c0_i32 = arith.constant 0 : i32
    %c0_i32_0 = arith.constant 0 : i32
    %c0_i32_1 = arith.constant 0 : i32
    return %c0_i32, %c0_i32_0 : i32, i32
  }
}

</mosaic_0001>

<llo_original>
// kernel: tpu_custom_call.1
$region0: #{tpu_custom_call.1}
  #allocation0 [shape = 'u32[]', space=smem, size = 0x4, offset = 0x4, fixed_abs, tag = 'smem constant byte address 0x4 - core index']
  #allocation1 [shape = 'u32[144,128]{1,0:T(1,128)}', space=vmem, size = 0x12000, scoped, tag = 'internal scratch']
  %s0 = inlined_call_operand.vmem [shape: f32[64,16], index: 0, kind: input, shape index: {}]
  %s1 = inlined_call_operand.hbm [shape: f32[1,16], index: 1, kind: output, shape index: {0}]
  %s2 = inlined_call_operand.hbm [shape: f32[1,16], index: 2, kind: output, shape index: {1}]
  %3 = xla_tuple %s1, %s2
  %s4 = sld [smem:[#allocation0]]
  $region26: #{tpu_custom_call.1} parent=0
    _
  %s6 = ssub.s32 1, %s4
  %s7 = scalar_select 0, %s6, %s4
  $region1: #{tpu_custom_call.1} parent=0
    #allocation2 [shape = 'u8[512]{0}', space=vmem, size = 0x400, scoped, tag = 'output window, operand 0, single buffered']
    #allocation3 [shape = 's32[1]{0}', space=sflag, size = 0x4, scoped, tag = 'scoped memory for tpu_custom_call.1']
    #allocation4 [shape = 'u8[512]{0}', space=vmem, size = 0x400, scoped, tag = 'output window, operand 1, single buffered']
    #allocation5 [shape = 's32[1]{0}', space=sflag, size = 0x4, scoped, tag = 'scoped memory for tpu_custom_call.1']
    %8 = vsyncpa [#allocation3], 0
    %9 = vsyncpa [#allocation5], 0
    // Predicated region
    $region2: #{tpu_custom_call.1} parent=1 // pred_check
      _
    $region3: #{tpu_custom_call.1} parent=1 // pred_check_branch
      %11 = sbr.rel (0) target = $region5
    $region4: #{tpu_custom_call.1} parent=1 // pred_region
      _
    $region5: #{tpu_custom_call.1} parent=1 // pred_fallthru
      _
    %p12 = scmp.eq.s32.totalorder 0, 0
    // Predicated region
    $region6: #{tpu_custom_call.1} parent=1 // pred_check
      %p13 = pneg %p12
    $region7: #{tpu_custom_call.1} parent=1 // pred_check_branch
      %15 = sbr.rel (%p13) target = $region9
    $region8: #{tpu_custom_call.1} parent=1 // pred_region
      %vm16 = vcmask 122880
      %17 = vst.msk [vmem:[#allocation2] sm:$0x1] %vm16, 0.0
      %18 = vst.msk [vmem:[#allocation4] sm:$0x1] %vm16, 0.0
    $region9: #{tpu_custom_call.1} parent=1 // pred_fallthru
      _
    %v19 = vld [vmem:[%s0] sm:$0xff]
    %v20 = vld [vmem:[%s0 + $0x8] sm:$0xff]
    %v21 = vld [vmem:[%s0 + $0x10] sm:$0xff]
    %v22 = vld [vmem:[%s0 + $0x18] sm:$0xff]
    %v23 = vld [vmem:[%s0 + $0x20] sm:$0xff]
    %v24 = vld [vmem:[%s0 + $0x28] sm:$0xff]
    %v25 = vld [vmem:[%s0 + $0x30] sm:$0xff]
    %v26 = vld [vmem:[%s0 + $0x38] sm:$0xff]
    %v27 = vld [vmem:[#allocation2] sm:$0x1]
    %vm28 = vcmask 130048
    %v29 = vsel %vm28, %v19, 0.0
    %v30 = vsel %vm28, %v20, 0.0
    %v31 = vadd.f32 %v29, %v30
    %v32 = vsel %vm28, %v21, 0.0
    %v33 = vadd.f32 %v31, %v32
    %v34 = vsel %vm28, %v22, 0.0
    %v35 = vadd.f32 %v33, %v34
    %v36 = vsel %vm28, %v23, 0.0
    %v37 = vadd.f32 %v35, %v36
    %v38 = vsel %vm28, %v24, 0.0
    %v39 = vadd.f32 %v37, %v38
    %v40 = vsel %vm28, %v25, 0.0
    %v41 = vadd.f32 %v39, %v40
    %v42 = vsel %vm28, %v26, 0.0
    %v43 = vadd.f32 %v41, %v42
    %v44 = vrot.slane %v43, 4
    %v45 = vadd.f32 %v43, %v44
    %v46 = vrot.slane %v45, 2
    %v47 = vadd.f32 %v45, %v46
    %v48 = vrot.slane %v47, 1
    %v49 = vadd.f32 %v47, %v48
    %v50 = vadd.f32 %v27, %v49
    %vm51 = vcmask 122880
    %52 = vst.msk [vmem:[#allocation2] sm:$0x1] %vm51, %v50
    %v53 = vld [vmem:[#allocation4] sm:$0x1]
    %v54 = vmul.f32 %v19, %v19
    %v55 = vmul.f32 %v20, %v20
    %v56 = vmul.f32 %v21, %v21
    %v57 = vmul.f32 %v22, %v22
    %v58 = vmul.f32 %v23, %v23
    %v59 = vmul.f32 %v24, %v24
    %v60 = vmul.f32 %v25, %v25
    %v61 = vmul.f32 %v26, %v26
    %v62 = vsel %vm28, %v54, 0.0
    %v63 = vsel %vm28, %v55, 0.0
    %v64 = vadd.f32 %v62, %v63
    %v65 = vsel %vm28, %v56, 0.0
    %v66 = vadd.f32 %v64, %v65
    %v67 = vsel %vm28, %v57, 0.0
    %v68 = vadd.f32 %v66, %v67
    %v69 = vsel %vm28, %v58, 0.0
    %v70 = vadd.f32 %v68, %v69
    %v71 = vsel %vm28, %v59, 0.0
    %v72 = vadd.f32 %v70, %v71
    %v73 = vsel %vm28, %v60, 0.0
    %v74 = vadd.f32 %v72, %v73
    %v75 = vsel %vm28, %v61, 0.0
    %v76 = vadd.f32 %v74, %v75
    %v77 = vrot.slane %v76, 4
    %v78 = vadd.f32 %v76, %v77
    %v79 = vrot.slane %v78, 2
    %v80 = vadd.f32 %v78, %v79
    %v81 = vrot.slane %v80, 1
    %v82 = vadd.f32 %v80, %v81
    %v83 = vadd.f32 %v53, %v82
    %84 = vst.msk [vmem:[#allocation4] sm:$0x1] %vm51, %v83
    // Predicated region
    $region10: #{tpu_custom_call.1} parent=1 // pred_check
      _
    $region11: #{tpu_custom_call.1} parent=1 // pred_check_branch
      %86 = sbr.rel (0) target = $region13
    $region12: #{tpu_custom_call.1} parent=1 // pred_region
      %s88 = ssub.s32 16, 16
      %89 = vsyncadd [#allocation3], %s88
      %s91 = sshll.u32 [#allocation2], 4
      %s92 = int_to_ptr.vmem [resolvable:$true] %s91
      %94 = dma.vmem_to_hbm [thread:$0]  %s92, 16, %s1, [#allocation3]
    $region13: #{tpu_custom_call.1} parent=1 // pred_fallthru
      _
    // Predicated region
    $region14: #{tpu_custom_call.1} parent=1 // pred_check
      _
    $region15: #{tpu_custom_call.1} parent=1 // pred_check_branch
      %96 = sbr.rel (0) target = $region17
    $region16: #{tpu_custom_call.1} parent=1 // pred_region
      %s98 = ssub.s32 16, 16
      %99 = vsyncadd [#allocation5], %s98
      %s101 = sshll.u32 [#allocation4], 4
      %s102 = int_to_ptr.vmem [resolvable:$true] %s101
      %104 = dma.vmem_to_hbm [thread:$0]  %s102, 16, %s2, [#allocation5]
    $region17: #{tpu_custom_call.1} parent=1 // pred_fallthru
      _
    // Predicated region
    $region18: #{tpu_custom_call.1} parent=1 // pred_check
      _
    $region19: #{tpu_custom_call.1} parent=1 // pred_check_branch
      %106 = sbr.rel (0) target = $region21
    $region20: #{tpu_custom_call.1} parent=1 // pred_region
      %107 = dma.done [#allocation3], 16
    $region21: #{tpu_custom_call.1} parent=1 // pred_fallthru
      _
    // Predicated region
    $region22: #{tpu_custom_call.1} parent=1 // pred_check
      _
    $region23: #{tpu_custom_call.1} parent=1 // pred_check_branch
      %109 = sbr.rel (0) target = $region25
    $region24: #{tpu_custom_call.1} parent=1 // pred_region
      %110 = dma.done [#allocation5], 16
    $region25: #{tpu_custom_call.1} parent=1 // pred_fallthru
      _
    %111 = vsyncpa [#allocation3], 1
    %112 = vsyncpa [#allocation5], 1

</llo_original>
